<compile_context>
chip_gen: v5e
topology: v5e:2x2
jax: 0.10.0
libtpu: 0.0.40
codegen_flags: <defaults>
</compile_context>

<pallas_src>
import jax
import jax.numpy as jnp
from jax.experimental import pallas as pl
from jax.experimental.pallas import tpu as pltpu

NEG_SLOPE = 0.01  # torch.nn.LeakyReLU default negative_slope


def _leaky_relu(x):
    return jnp.where(x >= 0, x, NEG_SLOPE * x)


def concept_embedding_kernel(
    x_ref,      # (B, F)                 shared across concepts
    w1_ref,     # (1, F, C*2E)           W1 of all concepts in tile, lane-concat
    b1_ref,     # (1, 1, C*2E)
    w2p_ref,    # (C, 2E, E)             columns [:E] of W2_i
    w2n_ref,    # (C, 2E, E)             columns [E:] of W2_i
    b2p_ref,    # (C, 1, E)
    b2n_ref,    # (C, 1, E)
    wp1p_ref,   # (E, 2E)                rows [:E] of shared Wp1
    wp1n_ref,   # (E, 2E)                rows [E:] of shared Wp1
    bp1_ref,    # (1, 2E)
    wp2_ref,    # (1, 2E)                Wp2^T as a row (VPU multiply + lane reduce)
    bp2_ref,    # (1,)                   SMEM scalar
    cemb_ref,   # out: (1, B, C*E)       lane-dense slab
    cpred_ref,  # out: (1, B, C)
):
    C = w2p_ref.shape[0]
    E2 = w2p_ref.shape[1]
    B = x_ref.shape[0]

    x = x_ref[...]                                               # (B, F)
    w_dtype = w2p_ref.dtype

    # --- first per-concept linear, folded across the tile (one MXU matmul) ---
    h_all = jnp.dot(x, w1_ref[0], preferred_element_type=jnp.float32) + b1_ref[0]
    h_all = _leaky_relu(h_all).astype(w_dtype)                   # (B, C*2E)

    # --- second per-concept linear (static unroll; static lane slices) -------
    ctx_pos_parts = []
    ctx_neg_parts = []
    for c in range(C):
        h_c = h_all[:, c * E2:(c + 1) * E2]                      # (B, 2E)
        cp = jnp.dot(h_c, w2p_ref[c], preferred_element_type=jnp.float32) + b2p_ref[c]
        cn = jnp.dot(h_c, w2n_ref[c], preferred_element_type=jnp.float32) + b2n_ref[c]
        ctx_pos_parts.append(_leaky_relu(cp))                    # (B, E) f32
        ctx_neg_parts.append(_leaky_relu(cn))                    # (B, E) f32

    # Fold the concept tile into the M dimension for the shared head
    # (sublane concat — cheap).
    ctx_pos = jnp.concatenate(ctx_pos_parts, axis=0)             # (C*B, E)
    ctx_neg = jnp.concatenate(ctx_neg_parts, axis=0)             # (C*B, E)

    # --- shared concept prob predictor ---------------------------------------
    p = (jnp.dot(ctx_pos.astype(w_dtype), wp1p_ref[...],
                 preferred_element_type=jnp.float32)
         + jnp.dot(ctx_neg.astype(w_dtype), wp1n_ref[...],
                   preferred_element_type=jnp.float32)
         + bp1_ref[...])                                         # (C*B, 2E)
    p = _leaky_relu(p)

    # Degenerate (2E, 1) matmul -> VPU multiply + XLU lane reduce (MXU stays free).
    logit = jnp.sum(p * wp2_ref[...], axis=-1, keepdims=True) + bp2_ref[0]
    # exp runs on the EUP; the divide lowers to reciprocal + multiply.
    c_pred = 1.0 / (1.0 + jnp.exp(-logit))                       # (C*B, 1)

    c_emb = ctx_pos * c_pred + ctx_neg * (1.0 - c_pred)          # (C*B, E)

    # --- lane-dense stores: (B, C*E) and (B, C) slabs -------------------------
    emb_slab = jnp.concatenate(
        [c_emb[c * B:(c + 1) * B, :] for c in range(C)], axis=1)    # (B, C*E)
    pred_slab = jnp.concatenate(
        [c_pred[c * B:(c + 1) * B, :] for c in range(C)], axis=1)   # (B, C)

    cemb_ref[...] = emb_slab[None].astype(cemb_ref.dtype)
    cpred_ref[...] = pred_slab[None].astype(cpred_ref.dtype)


def _choose_c_tile(n_concepts, in_features, emb_size, bytes_per_elem=4):
    """Largest divisor of n_concepts (capped at 8) whose per-step weight tile
    keeps double-buffered VMEM comfortably under the default scoped limit
    (important on v7x: 64 MiB VMEM / 32 MiB default scoped limit). A cap of 8
    also keeps >=2 parallel grid steps when n_concepts is large (megacore)."""
    e2 = 2 * emb_size
    per_concept = bytes_per_elem * (in_features * e2 + 2 * e2 * emb_size + 3 * e2)
    budget = 8 * 1024 * 1024            # x2 double-buffering -> <= ~16 MiB of weights
    cap = int(max(1, min(8, budget // max(per_concept, 1), n_concepts)))
    for d in range(cap, 0, -1):
        if n_concepts % d == 0:
            return d
    return 1


def concept_embedding_forward(x, params, *, n_concepts, emb_size, c_tile=None,
                              compute_dtype=None):
    """Pallas forward. Returns (c_emb (B, n_concepts, E), c_pred (B, n_concepts)).

    compute_dtype: optional dtype for the MXU operands (e.g. jnp.bfloat16 on
    v5e/v6e; loosen test tolerances if used). Accumulation is always f32.
    """
    B, F = x.shape
    E = emb_size
    E2 = 2 * E
    w1, b1, w2, b2, wp1, bp1, wp2, bp2 = params

    if c_tile is None:
        c_tile = _choose_c_tile(n_concepts, F, E)
    assert n_concepts % c_tile == 0, "c_tile must divide n_concepts"
    n_tiles = n_concepts // c_tile

    cdt = x.dtype if compute_dtype is None else compute_dtype
    out_dtype = x.dtype

    # One-time plain-JAX parameter repacking:
    #  * W1 of each concept tile lane-concatenated -> one matmul per step,
    #  * pos/neg splits of W2 / Wp1 so the kernel never lane-slices ctx at a
    #    non-128 boundary.
    xk = x.astype(cdt)
    w1cat = (w1.reshape(n_tiles, c_tile, F, E2)
               .transpose(0, 2, 1, 3)
               .reshape(n_tiles, F, c_tile * E2)
               .astype(cdt))                                  # (n_t, F, C*2E)
    b1cat = b1.reshape(n_tiles, 1, c_tile * E2).astype(jnp.float32)
    w2p = w2[:, :, :E].astype(cdt)                            # (n_c, 2E, E)
    w2n = w2[:, :, E:].astype(cdt)
    b2p = b2[:, :E].reshape(n_concepts, 1, E).astype(jnp.float32)
    b2n = b2[:, E:].reshape(n_concepts, 1, E).astype(jnp.float32)
    wp1p = wp1[:E, :].astype(cdt)                             # (E, 2E)
    wp1n = wp1[E:, :].astype(cdt)
    bp1r = bp1.reshape(1, E2).astype(jnp.float32)
    wp2r = wp2.reshape(1, E2).astype(jnp.float32)             # Wp2^T row
    bp2r = bp2.reshape(1).astype(jnp.float32)                 # SMEM scalar

    # Shared operands use a constant block index -> fetched once, not re-DMA'd
    # per concept tile.
    shared2d = lambda i: (0, 0)
    tiled3d = lambda i: (i, 0, 0)

    cemb_t, cpred_t = pl.pallas_call(
        concept_embedding_kernel,
        out_shape=(
            jax.ShapeDtypeStruct((n_tiles, B, c_tile * E), out_dtype),
            jax.ShapeDtypeStruct((n_tiles, B, c_tile), out_dtype),
        ),
        grid=(n_tiles,),
        in_specs=[
            pl.BlockSpec((B, F), shared2d),                     # x (shared)
            pl.BlockSpec((1, F, c_tile * E2), tiled3d),         # W1 tile (lane-cat)
            pl.BlockSpec((1, 1, c_tile * E2), tiled3d),         # b1 tile (lane-cat)
            pl.BlockSpec((c_tile, E2, E), tiled3d),             # W2 pos tile
            pl.BlockSpec((c_tile, E2, E), tiled3d),             # W2 neg tile
            pl.BlockSpec((c_tile, 1, E), tiled3d),              # b2 pos tile
            pl.BlockSpec((c_tile, 1, E), tiled3d),              # b2 neg tile
            pl.BlockSpec((E, E2), shared2d),                    # Wp1 pos (shared)
            pl.BlockSpec((E, E2), shared2d),                    # Wp1 neg (shared)
            pl.BlockSpec((1, E2), shared2d),                    # bp1
            pl.BlockSpec((1, E2), shared2d),                    # Wp2^T row
            pl.BlockSpec(memory_space=pltpu.MemorySpace.SMEM),  # bp2 scalar
        ],
        out_specs=(
            pl.BlockSpec((1, B, c_tile * E), tiled3d),
            pl.BlockSpec((1, B, c_tile), tiled3d),
        ),
        compiler_params=pltpu.CompilerParams(
            dimension_semantics=("parallel",)),   # concept-tile axis -> both TCs
    )(xk, w1cat, b1cat, w2p, w2n, b2p, b2n, wp1p, wp1n, bp1r, wp2r, bp2r)

    # Tile-major -> PyTorch layout. For n_tiles == 1 the transpose is free.
    c_emb = cemb_t.transpose(1, 0, 2).reshape(B, n_concepts, E)
    c_pred = cpred_t.transpose(1, 0, 2).reshape(B, n_concepts)
    return c_emb, c_pred


def concept_embedding_reference(x, params, *, n_concepts, emb_size):
    """Pure-JAX reference mirroring the PyTorch forward (c=None path)."""
    w1, b1, w2, b2, wp1, bp1, wp2, bp2 = params
    emb_list, pred_list = [], []
    for i in range(n_concepts):
        h = _leaky_relu(x @ w1[i] + b1[i])
        ctx = _leaky_relu(h @ w2[i] + b2[i])
        p = _leaky_relu(ctx @ wp1 + bp1)
        c_pred = jax.nn.sigmoid(p @ wp2 + bp2)                     # (B, 1)
        c_emb = ctx[:, :emb_size] * c_pred + ctx[:, emb_size:] * (1 - c_pred)
        emb_list.append(c_emb[:, None, :])
        pred_list.append(c_pred)
    return jnp.concatenate(emb_list, axis=1), jnp.concatenate(pred_list, axis=1)


def init_params(key, in_features, n_concepts, emb_size):
    """Deterministic parameter init (PyTorch-Linear-style uniform +-1/sqrt(fan_in))."""
    E2 = 2 * emb_size
    ks = jax.random.split(key, 8)

    def unif(k, shape, fan_in):
        bound = 1.0 / jnp.sqrt(fan_in)
        return jax.random.uniform(k, shape, jnp.float32, -bound, bound)

    w1 = unif(ks[0], (n_concepts, in_features, E2), in_features)
    b1 = unif(ks[1], (n_concepts, E2), in_features)
    w2 = unif(ks[2], (n_concepts, E2, E2), E2)
    b2 = unif(ks[3], (n_concepts, E2), E2)
    wp1 = unif(ks[4], (E2, E2), E2)
    bp1 = unif(ks[5], (E2,), E2)
    wp2 = unif(ks[6], (E2, 1), E2)
    bp2 = unif(ks[7], (1,), E2)
    return (w1, b1, w2, b2, wp1, bp1, wp2, bp2)


if __name__ == "__main__":
    B, in_features, n_concepts, emb_size = 8, 32, 4, 16

    key = jax.random.PRNGKey(0)
    kx, kp = jax.random.split(key)
    x = jax.random.normal(kx, (B, in_features), dtype=jnp.float32)
    params = init_params(kp, in_features, n_concepts, emb_size)

    c_emb, c_pred = concept_embedding_forward(
        x, params, n_concepts=n_concepts, emb_size=emb_size
    )
    jax.block_until_ready((c_emb, c_pred))

    ref_emb, ref_pred = concept_embedding_reference(
        x, params, n_concepts=n_concepts, emb_size=emb_size
    )

    assert c_emb.shape == (B, n_concepts, emb_size)
    assert c_pred.shape == (B, n_concepts)
    assert jnp.allclose(c_emb, ref_emb, atol=1e-5, rtol=1e-5)
    assert jnp.allclose(c_pred, ref_pred, atol=1e-5, rtol=1e-5)

    print("KERNEL_OK")
</pallas_src>

<mosaic_0001>
module attributes {stable_mosaic.version = 11 : i64} {
  func.func @concept_embedding_kernel(%arg0: i32, %arg1: memref<8x32xf32, #tpu.memory_space<vmem>>, %arg2: memref<1x32x128xf32, #tpu.memory_space<vmem>>, %arg3: memref<1x1x128xf32, #tpu.memory_space<vmem>>, %arg4: memref<4x32x16xf32, #tpu.memory_space<vmem>>, %arg5: memref<4x32x16xf32, #tpu.memory_space<vmem>>, %arg6: memref<4x1x16xf32, #tpu.memory_space<vmem>>, %arg7: memref<4x1x16xf32, #tpu.memory_space<vmem>>, %arg8: memref<16x32xf32, #tpu.memory_space<vmem>>, %arg9: memref<16x32xf32, #tpu.memory_space<vmem>>, %arg10: memref<1x32xf32, #tpu.memory_space<vmem>>, %arg11: memref<1x32xf32, #tpu.memory_space<vmem>>, %arg12: memref<1xf32, #tpu.memory_space<smem>>, %arg13: memref<1x8x64xf32, #tpu.memory_space<vmem>>, %arg14: memref<1x8x4xf32, #tpu.memory_space<vmem>>) attributes {dimension_semantics = [#tpu.dimension_semantics<parallel>], iteration_bounds = array<i64: 1>, scalar_prefetch = 0 : i64, scratch_operands = 0 : i64, tpu.core_type = #tpu.core_type<tc>, window_params = [{pipeline_mode = #tpu.pipeline_mode<synchronous>, transform_indices = @transform_0, window_bounds = array<i64: 8, 32>}, {transform_indices = @transform_1, window_bounds = array<i64: 1, 32, 128>}, {transform_indices = @transform_2, window_bounds = array<i64: 1, 1, 128>}, {transform_indices = @transform_3, window_bounds = array<i64: 4, 32, 16>}, {transform_indices = @transform_4, window_bounds = array<i64: 4, 32, 16>}, {transform_indices = @transform_5, window_bounds = array<i64: 4, 1, 16>}, {transform_indices = @transform_6, window_bounds = array<i64: 4, 1, 16>}, {pipeline_mode = #tpu.pipeline_mode<synchronous>, transform_indices = @transform_7, window_bounds = array<i64: 16, 32>}, {pipeline_mode = #tpu.pipeline_mode<synchronous>, transform_indices = @transform_8, window_bounds = array<i64: 16, 32>}, {pipeline_mode = #tpu.pipeline_mode<synchronous>, transform_indices = @transform_9, window_bounds = array<i64: 1, 32>}, {pipeline_mode = #tpu.pipeline_mode<synchronous>, transform_indices = @transform_10, window_bounds = array<i64: 1, 32>}, {transform_indices = @transform_11, window_bounds = array<i64: 1>}, {transform_indices = @transform_12, window_bounds = array<i64: 1, 8, 64>}, {transform_indices = @transform_13, window_bounds = array<i64: 1, 8, 4>}]} {
    %c0 = arith.constant 0 : index
    %c0_0 = arith.constant 0 : index
    %0 = vector.load %arg1[%c0, %c0_0] : memref<8x32xf32, #tpu.memory_space<vmem>>, vector<8x32xf32>
    %c0_1 = arith.constant 0 : index
    %c0_2 = arith.constant 0 : index
    %c0_3 = arith.constant 0 : index
    %1 = vector.load %arg2[%c0_1, %c0_2, %c0_3] : memref<1x32x128xf32, #tpu.memory_space<vmem>>, vector<1x32x128xf32>
    %2 = vector.shape_cast %1 : vector<1x32x128xf32> to vector<32x128xf32>
    %cst = arith.constant dense<0.000000e+00> : vector<8x128xf32>
    %3 = tpu.matmul %0, %2, %cst {dimension_numbers = #tpu.dot_dimension_numbers<[1], [0], [0], [1], [0, 0, 1, 1], [], []>} : vector<8x32xf32>, vector<32x128xf32>, vector<8x128xf32> -> vector<8x128xf32>
    %c0_4 = arith.constant 0 : index
    %c0_5 = arith.constant 0 : index
    %c0_6 = arith.constant 0 : index
    %4 = vector.load %arg3[%c0_4, %c0_5, %c0_6] : memref<1x1x128xf32, #tpu.memory_space<vmem>>, vector<1x1x128xf32>
    %5 = vector.shape_cast %4 : vector<1x1x128xf32> to vector<1x128xf32>
    %6 = vector.broadcast %5 : vector<1x128xf32> to vector<8x128xf32>
    %7 = arith.addf %3, %6 : vector<8x128xf32>
    %cst_7 = arith.constant 0.000000e+00 : f32
    %8 = vector.broadcast %cst_7 : f32 to vector<8x128xf32>
    %9 = arith.cmpf oge, %7, %8 : vector<8x128xf32>
    %cst_8 = arith.constant 0.00999999977 : f32
    %10 = vector.broadcast %cst_8 : f32 to vector<8x128xf32>
    %11 = arith.mulf %10, %7 : vector<8x128xf32>
    %12 = arith.select %9, %7, %11 : vector<8x128xi1>, vector<8x128xf32>
    %13 = vector.extract_strided_slice %12 {offsets = [0, 0], sizes = [8, 32], strides = [1, 1]} : vector<8x128xf32> to vector<8x32xf32>
    %c0_9 = arith.constant 0 : index
    %c0_10 = arith.constant 0 : index
    %c0_11 = arith.constant 0 : index
    %14 = vector.load %arg4[%c0_9, %c0_10, %c0_11] : memref<4x32x16xf32, #tpu.memory_space<vmem>>, vector<1x32x16xf32>
    %15 = vector.shape_cast %14 : vector<1x32x16xf32> to vector<32x16xf32>
    %cst_12 = arith.constant dense<0.000000e+00> : vector<8x16xf32>
    %16 = tpu.matmul %13, %15, %cst_12 {dimension_numbers = #tpu.dot_dimension_numbers<[1], [0], [0], [1], [0, 0, 1, 1], [], []>} : vector<8x32xf32>, vector<32x16xf32>, vector<8x16xf32> -> vector<8x16xf32>
    %c0_13 = arith.constant 0 : index
    %c0_14 = arith.constant 0 : index
    %c0_15 = arith.constant 0 : index
    %17 = vector.load %arg6[%c0_13, %c0_14, %c0_15] : memref<4x1x16xf32, #tpu.memory_space<vmem>>, vector<1x1x16xf32>
    %18 = vector.shape_cast %17 : vector<1x1x16xf32> to vector<1x16xf32>
    %19 = vector.broadcast %18 : vector<1x16xf32> to vector<8x16xf32>
    %20 = arith.addf %16, %19 : vector<8x16xf32>
    %c0_16 = arith.constant 0 : index
    %c0_17 = arith.constant 0 : index
    %c0_18 = arith.constant 0 : index
    %21 = vector.load %arg5[%c0_16, %c0_17, %c0_18] : memref<4x32x16xf32, #tpu.memory_space<vmem>>, vector<1x32x16xf32>
    %22 = vector.shape_cast %21 : vector<1x32x16xf32> to vector<32x16xf32>
    %cst_19 = arith.constant dense<0.000000e+00> : vector<8x16xf32>
    %23 = tpu.matmul %13, %22, %cst_19 {dimension_numbers = #tpu.dot_dimension_numbers<[1], [0], [0], [1], [0, 0, 1, 1], [], []>} : vector<8x32xf32>, vector<32x16xf32>, vector<8x16xf32> -> vector<8x16xf32>
    %c0_20 = arith.constant 0 : index
    %c0_21 = arith.constant 0 : index
    %c0_22 = arith.constant 0 : index
    %24 = vector.load %arg7[%c0_20, %c0_21, %c0_22] : memref<4x1x16xf32, #tpu.memory_space<vmem>>, vector<1x1x16xf32>
    %25 = vector.shape_cast %24 : vector<1x1x16xf32> to vector<1x16xf32>
    %26 = vector.broadcast %25 : vector<1x16xf32> to vector<8x16xf32>
    %27 = arith.addf %23, %26 : vector<8x16xf32>
    %cst_23 = arith.constant 0.000000e+00 : f32
    %28 = vector.broadcast %cst_23 : f32 to vector<8x16xf32>
    %29 = arith.cmpf oge, %20, %28 : vector<8x16xf32>
    %cst_24 = arith.constant 0.00999999977 : f32
    %30 = vector.broadcast %cst_24 : f32 to vector<8x16xf32>
    %31 = arith.mulf %30, %20 : vector<8x16xf32>
    %32 = arith.select %29, %20, %31 : vector<8x16xi1>, vector<8x16xf32>
    %cst_25 = arith.constant 0.000000e+00 : f32
    %33 = vector.broadcast %cst_25 : f32 to vector<8x16xf32>
    %34 = arith.cmpf oge, %27, %33 : vector<8x16xf32>
    %cst_26 = arith.constant 0.00999999977 : f32
    %35 = vector.broadcast %cst_26 : f32 to vector<8x16xf32>
    %36 = arith.mulf %35, %27 : vector<8x16xf32>
    %37 = arith.select %34, %27, %36 : vector<8x16xi1>, vector<8x16xf32>
    %38 = vector.extract_strided_slice %12 {offsets = [0, 32], sizes = [8, 32], strides = [1, 1]} : vector<8x128xf32> to vector<8x32xf32>
    %c1 = arith.constant 1 : index
    %c0_27 = arith.constant 0 : index
    %c0_28 = arith.constant 0 : index
    %39 = vector.load %arg4[%c1, %c0_27, %c0_28] : memref<4x32x16xf32, #tpu.memory_space<vmem>>, vector<1x32x16xf32>
    %40 = vector.shape_cast %39 : vector<1x32x16xf32> to vector<32x16xf32>
    %cst_29 = arith.constant dense<0.000000e+00> : vector<8x16xf32>
    %41 = tpu.matmul %38, %40, %cst_29 {dimension_numbers = #tpu.dot_dimension_numbers<[1], [0], [0], [1], [0, 0, 1, 1], [], []>} : vector<8x32xf32>, vector<32x16xf32>, vector<8x16xf32> -> vector<8x16xf32>
    %c1_30 = arith.constant 1 : index
    %c0_31 = arith.constant 0 : index
    %c0_32 = arith.constant 0 : index
    %42 = vector.load %arg6[%c1_30, %c0_31, %c0_32] : memref<4x1x16xf32, #tpu.memory_space<vmem>>, vector<1x1x16xf32>
    %43 = vector.shape_cast %42 : vector<1x1x16xf32> to vector<1x16xf32>
    %44 = vector.broadcast %43 : vector<1x16xf32> to vector<8x16xf32>
    %45 = arith.addf %41, %44 : vector<8x16xf32>
    %c1_33 = arith.constant 1 : index
    %c0_34 = arith.constant 0 : index
    %c0_35 = arith.constant 0 : index
    %46 = vector.load %arg5[%c1_33, %c0_34, %c0_35] : memref<4x32x16xf32, #tpu.memory_space<vmem>>, vector<1x32x16xf32>
    %47 = vector.shape_cast %46 : vector<1x32x16xf32> to vector<32x16xf32>
    %cst_36 = arith.constant dense<0.000000e+00> : vector<8x16xf32>
    %48 = tpu.matmul %38, %47, %cst_36 {dimension_numbers = #tpu.dot_dimension_numbers<[1], [0], [0], [1], [0, 0, 1, 1], [], []>} : vector<8x32xf32>, vector<32x16xf32>, vector<8x16xf32> -> vector<8x16xf32>
    %c1_37 = arith.constant 1 : index
    %c0_38 = arith.constant 0 : index
    %c0_39 = arith.constant 0 : index
    %49 = vector.load %arg7[%c1_37, %c0_38, %c0_39] : memref<4x1x16xf32, #tpu.memory_space<vmem>>, vector<1x1x16xf32>
    %50 = vector.shape_cast %49 : vector<1x1x16xf32> to vector<1x16xf32>
    %51 = vector.broadcast %50 : vector<1x16xf32> to vector<8x16xf32>
    %52 = arith.addf %48, %51 : vector<8x16xf32>
    %cst_40 = arith.constant 0.000000e+00 : f32
    %53 = vector.broadcast %cst_40 : f32 to vector<8x16xf32>
    %54 = arith.cmpf oge, %45, %53 : vector<8x16xf32>
    %cst_41 = arith.constant 0.00999999977 : f32
    %55 = vector.broadcast %cst_41 : f32 to vector<8x16xf32>
    %56 = arith.mulf %55, %45 : vector<8x16xf32>
    %57 = arith.select %54, %45, %56 : vector<8x16xi1>, vector<8x16xf32>
    %cst_42 = arith.constant 0.000000e+00 : f32
    %58 = vector.broadcast %cst_42 : f32 to vector<8x16xf32>
    %59 = arith.cmpf oge, %52, %58 : vector<8x16xf32>
    %cst_43 = arith.constant 0.00999999977 : f32
    %60 = vector.broadcast %cst_43 : f32 to vector<8x16xf32>
    %61 = arith.mulf %60, %52 : vector<8x16xf32>
    %62 = arith.select %59, %52, %61 : vector<8x16xi1>, vector<8x16xf32>
    %63 = vector.extract_strided_slice %12 {offsets = [0, 64], sizes = [8, 32], strides = [1, 1]} : vector<8x128xf32> to vector<8x32xf32>
    %c2 = arith.constant 2 : index
    %c0_44 = arith.constant 0 : index
    %c0_45 = arith.constant 0 : index
    %64 = vector.load %arg4[%c2, %c0_44, %c0_45] : memref<4x32x16xf32, #tpu.memory_space<vmem>>, vector<1x32x16xf32>
    %65 = vector.shape_cast %64 : vector<1x32x16xf32> to vector<32x16xf32>
    %cst_46 = arith.constant dense<0.000000e+00> : vector<8x16xf32>
    %66 = tpu.matmul %63, %65, %cst_46 {dimension_numbers = #tpu.dot_dimension_numbers<[1], [0], [0], [1], [0, 0, 1, 1], [], []>} : vector<8x32xf32>, vector<32x16xf32>, vector<8x16xf32> -> vector<8x16xf32>
    %c2_47 = arith.constant 2 : index
    %c0_48 = arith.constant 0 : index
    %c0_49 = arith.constant 0 : index
    %67 = vector.load %arg6[%c2_47, %c0_48, %c0_49] : memref<4x1x16xf32, #tpu.memory_space<vmem>>, vector<1x1x16xf32>
    %68 = vector.shape_cast %67 : vector<1x1x16xf32> to vector<1x16xf32>
    %69 = vector.broadcast %68 : vector<1x16xf32> to vector<8x16xf32>
    %70 = arith.addf %66, %69 : vector<8x16xf32>
    %c2_50 = arith.constant 2 : index
    %c0_51 = arith.constant 0 : index
    %c0_52 = arith.constant 0 : index
    %71 = vector.load %arg5[%c2_50, %c0_51, %c0_52] : memref<4x32x16xf32, #tpu.memory_space<vmem>>, vector<1x32x16xf32>
    %72 = vector.shape_cast %71 : vector<1x32x16xf32> to vector<32x16xf32>
    %cst_53 = arith.constant dense<0.000000e+00> : vector<8x16xf32>
    %73 = tpu.matmul %63, %72, %cst_53 {dimension_numbers = #tpu.dot_dimension_numbers<[1], [0], [0], [1], [0, 0, 1, 1], [], []>} : vector<8x32xf32>, vector<32x16xf32>, vector<8x16xf32> -> vector<8x16xf32>
    %c2_54 = arith.constant 2 : index
    %c0_55 = arith.constant 0 : index
    %c0_56 = arith.constant 0 : index
    %74 = vector.load %arg7[%c2_54, %c0_55, %c0_56] : memref<4x1x16xf32, #tpu.memory_space<vmem>>, vector<1x1x16xf32>
    %75 = vector.shape_cast %74 : vector<1x1x16xf32> to vector<1x16xf32>
    %76 = vector.broadcast %75 : vector<1x16xf32> to vector<8x16xf32>
    %77 = arith.addf %73, %76 : vector<8x16xf32>
    %cst_57 = arith.constant 0.000000e+00 : f32
    %78 = vector.broadcast %cst_57 : f32 to vector<8x16xf32>
    %79 = arith.cmpf oge, %70, %78 : vector<8x16xf32>
    %cst_58 = arith.constant 0.00999999977 : f32
    %80 = vector.broadcast %cst_58 : f32 to vector<8x16xf32>
    %81 = arith.mulf %80, %70 : vector<8x16xf32>
    %82 = arith.select %79, %70, %81 : vector<8x16xi1>, vector<8x16xf32>
    %cst_59 = arith.constant 0.000000e+00 : f32
    %83 = vector.broadcast %cst_59 : f32 to vector<8x16xf32>
    %84 = arith.cmpf oge, %77, %83 : vector<8x16xf32>
    %cst_60 = arith.constant 0.00999999977 : f32
    %85 = vector.broadcast %cst_60 : f32 to vector<8x16xf32>
    %86 = arith.mulf %85, %77 : vector<8x16xf32>
    %87 = arith.select %84, %77, %86 : vector<8x16xi1>, vector<8x16xf32>
    %88 = vector.extract_strided_slice %12 {offsets = [0, 96], sizes = [8, 32], strides = [1, 1]} : vector<8x128xf32> to vector<8x32xf32>
    %c3 = arith.constant 3 : index
    %c0_61 = arith.constant 0 : index
    %c0_62 = arith.constant 0 : index
    %89 = vector.load %arg4[%c3, %c0_61, %c0_62] : memref<4x32x16xf32, #tpu.memory_space<vmem>>, vector<1x32x16xf32>
    %90 = vector.shape_cast %89 : vector<1x32x16xf32> to vector<32x16xf32>
    %cst_63 = arith.constant dense<0.000000e+00> : vector<8x16xf32>
    %91 = tpu.matmul %88, %90, %cst_63 {dimension_numbers = #tpu.dot_dimension_numbers<[1], [0], [0], [1], [0, 0, 1, 1], [], []>} : vector<8x32xf32>, vector<32x16xf32>, vector<8x16xf32> -> vector<8x16xf32>
    %c3_64 = arith.constant 3 : index
    %c0_65 = arith.constant 0 : index
    %c0_66 = arith.constant 0 : index
    %92 = vector.load %arg6[%c3_64, %c0_65, %c0_66] : memref<4x1x16xf32, #tpu.memory_space<vmem>>, vector<1x1x16xf32>
    %93 = vector.shape_cast %92 : vector<1x1x16xf32> to vector<1x16xf32>
    %94 = vector.broadcast %93 : vector<1x16xf32> to vector<8x16xf32>
    %95 = arith.addf %91, %94 : vector<8x16xf32>
    %c3_67 = arith.constant 3 : index
    %c0_68 = arith.constant 0 : index
    %c0_69 = arith.constant 0 : index
    %96 = vector.load %arg5[%c3_67, %c0_68, %c0_69] : memref<4x32x16xf32, #tpu.memory_space<vmem>>, vector<1x32x16xf32>
    %97 = vector.shape_cast %96 : vector<1x32x16xf32> to vector<32x16xf32>
    %cst_70 = arith.constant dense<0.000000e+00> : vector<8x16xf32>
    %98 = tpu.matmul %88, %97, %cst_70 {dimension_numbers = #tpu.dot_dimension_numbers<[1], [0], [0], [1], [0, 0, 1, 1], [], []>} : vector<8x32xf32>, vector<32x16xf32>, vector<8x16xf32> -> vector<8x16xf32>
    %c3_71 = arith.constant 3 : index
    %c0_72 = arith.constant 0 : index
    %c0_73 = arith.constant 0 : index
    %99 = vector.load %arg7[%c3_71, %c0_72, %c0_73] : memref<4x1x16xf32, #tpu.memory_space<vmem>>, vector<1x1x16xf32>
    %100 = vector.shape_cast %99 : vector<1x1x16xf32> to vector<1x16xf32>
    %101 = vector.broadcast %100 : vector<1x16xf32> to vector<8x16xf32>
    %102 = arith.addf %98, %101 : vector<8x16xf32>
    %cst_74 = arith.constant 0.000000e+00 : f32
    %103 = vector.broadcast %cst_74 : f32 to vector<8x16xf32>
    %104 = arith.cmpf oge, %95, %103 : vector<8x16xf32>
    %cst_75 = arith.constant 0.00999999977 : f32
    %105 = vector.broadcast %cst_75 : f32 to vector<8x16xf32>
    %106 = arith.mulf %105, %95 : vector<8x16xf32>
    %107 = arith.select %104, %95, %106 : vector<8x16xi1>, vector<8x16xf32>
    %cst_76 = arith.constant 0.000000e+00 : f32
    %108 = vector.broadcast %cst_76 : f32 to vector<8x16xf32>
    %109 = arith.cmpf oge, %102, %108 : vector<8x16xf32>
    %cst_77 = arith.constant 0.00999999977 : f32
    %110 = vector.broadcast %cst_77 : f32 to vector<8x16xf32>
    %111 = arith.mulf %110, %102 : vector<8x16xf32>
    %112 = arith.select %109, %102, %111 : vector<8x16xi1>, vector<8x16xf32>
    %113 = tpu.concatenate %32, %57, %82, %107 in 0 : vector<8x16xf32>, vector<8x16xf32>, vector<8x16xf32>, vector<8x16xf32> -> vector<32x16xf32>
    %114 = tpu.concatenate %37, %62, %87, %112 in 0 : vector<8x16xf32>, vector<8x16xf32>, vector<8x16xf32>, vector<8x16xf32> -> vector<32x16xf32>
    %c0_78 = arith.constant 0 : index
    %c0_79 = arith.constant 0 : index
    %115 = vector.load %arg8[%c0_78, %c0_79] : memref<16x32xf32, #tpu.memory_space<vmem>>, vector<16x32xf32>
    %cst_80 = arith.constant dense<0.000000e+00> : vector<32x32xf32>
    %116 = tpu.matmul %113, %115, %cst_80 {dimension_numbers = #tpu.dot_dimension_numbers<[1], [0], [0], [1], [0, 0, 1, 1], [], []>} : vector<32x16xf32>, vector<16x32xf32>, vector<32x32xf32> -> vector<32x32xf32>
    %c0_81 = arith.constant 0 : index
    %c0_82 = arith.constant 0 : index
    %117 = vector.load %arg9[%c0_81, %c0_82] : memref<16x32xf32, #tpu.memory_space<vmem>>, vector<16x32xf32>
    %cst_83 = arith.constant dense<0.000000e+00> : vector<32x32xf32>
    %118 = tpu.matmul %114, %117, %cst_83 {dimension_numbers = #tpu.dot_dimension_numbers<[1], [0], [0], [1], [0, 0, 1, 1], [], []>} : vector<32x16xf32>, vector<16x32xf32>, vector<32x32xf32> -> vector<32x32xf32>
    %119 = arith.addf %116, %118 : vector<32x32xf32>
    %c0_84 = arith.constant 0 : index
    %c0_85 = arith.constant 0 : index
    %120 = vector.load %arg10[%c0_84, %c0_85] : memref<1x32xf32, #tpu.memory_space<vmem>>, vector<1x32xf32>
    %121 = vector.broadcast %120 : vector<1x32xf32> to vector<32x32xf32>
    %122 = arith.addf %119, %121 : vector<32x32xf32>
    %cst_86 = arith.constant 0.000000e+00 : f32
    %123 = vector.broadcast %cst_86 : f32 to vector<32x32xf32>
    %124 = arith.cmpf oge, %122, %123 : vector<32x32xf32>
    %cst_87 = arith.constant 0.00999999977 : f32
    %125 = vector.broadcast %cst_87 : f32 to vector<32x32xf32>
    %126 = arith.mulf %125, %122 : vector<32x32xf32>
    %127 = arith.select %124, %122, %126 : vector<32x32xi1>, vector<32x32xf32>
    %c0_88 = arith.constant 0 : index
    %c0_89 = arith.constant 0 : index
    %128 = vector.load %arg11[%c0_88, %c0_89] : memref<1x32xf32, #tpu.memory_space<vmem>>, vector<1x32xf32>
    %129 = vector.broadcast %128 : vector<1x32xf32> to vector<32x32xf32>
    %130 = arith.mulf %127, %129 : vector<32x32xf32>
    %cst_90 = arith.constant dense<0.000000e+00> : vector<32xf32>
    %131 = vector.multi_reduction <add>, %130, %cst_90 [1] : vector<32x32xf32> to vector<32xf32>
    %132 = vector.shape_cast %131 : vector<32xf32> to vector<32x1xf32>
    %c0_91 = arith.constant 0 : index
    %133 = memref.load %arg12[%c0_91] : memref<1xf32, #tpu.memory_space<smem>>
    %134 = vector.broadcast %133 : f32 to vector<32x1xf32>
    %135 = arith.addf %132, %134 : vector<32x1xf32>
    %cst_92 = arith.constant 0.000000e+00 : f32
    %136 = vector.broadcast %cst_92 : f32 to vector<32x1xf32>
    %137 = arith.subf %136, %135 : vector<32x1xf32>
    %138 = math.exp %137 : vector<32x1xf32>
    %cst_93 = arith.constant 1.000000e+00 : f32
    %139 = vector.broadcast %cst_93 : f32 to vector<32x1xf32>
    %140 = arith.addf %139, %138 : vector<32x1xf32>
    %cst_94 = arith.constant 1.000000e+00 : f32
    %141 = vector.broadcast %cst_94 : f32 to vector<32x1xf32>
    %142 = arith.divf %141, %140 : vector<32x1xf32>
    %143 = vector.broadcast %142 : vector<32x1xf32> to vector<32x16xf32>
    %144 = arith.mulf %113, %143 : vector<32x16xf32>
    %cst_95 = arith.constant 1.000000e+00 : f32
    %145 = vector.broadcast %cst_95 : f32 to vector<32x1xf32>
    %146 = arith.subf %145, %142 : vector<32x1xf32>
    %147 = vector.broadcast %146 : vector<32x1xf32> to vector<32x16xf32>
    %148 = arith.mulf %114, %147 : vector<32x16xf32>
    %149 = arith.addf %144, %148 : vector<32x16xf32>
    %150 = vector.extract_strided_slice %149 {offsets = [0, 0], sizes = [8, 16], strides = [1, 1]} : vector<32x16xf32> to vector<8x16xf32>
    %151 = vector.extract_strided_slice %149 {offsets = [8, 0], sizes = [8, 16], strides = [1, 1]} : vector<32x16xf32> to vector<8x16xf32>
    %152 = vector.extract_strided_slice %149 {offsets = [16, 0], sizes = [8, 16], strides = [1, 1]} : vector<32x16xf32> to vector<8x16xf32>
    %153 = vector.extract_strided_slice %149 {offsets = [24, 0], sizes = [8, 16], strides = [1, 1]} : vector<32x16xf32> to vector<8x16xf32>
    %154 = tpu.concatenate %150, %151, %152, %153 in 1 : vector<8x16xf32>, vector<8x16xf32>, vector<8x16xf32>, vector<8x16xf32> -> vector<8x64xf32>
    %155 = vector.extract_strided_slice %142 {offsets = [0, 0], sizes = [8, 1], strides = [1, 1]} : vector<32x1xf32> to vector<8x1xf32>
    %156 = vector.extract_strided_slice %142 {offsets = [8, 0], sizes = [8, 1], strides = [1, 1]} : vector<32x1xf32> to vector<8x1xf32>
    %157 = vector.extract_strided_slice %142 {offsets = [16, 0], sizes = [8, 1], strides = [1, 1]} : vector<32x1xf32> to vector<8x1xf32>
    %158 = vector.extract_strided_slice %142 {offsets = [24, 0], sizes = [8, 1], strides = [1, 1]} : vector<32x1xf32> to vector<8x1xf32>
    %159 = tpu.concatenate %155, %156, %157, %158 in 1 : vector<8x1xf32>, vector<8x1xf32>, vector<8x1xf32>, vector<8x1xf32> -> vector<8x4xf32>
    %160 = vector.shape_cast %154 : vector<8x64xf32> to vector<1x8x64xf32>
    %c0_96 = arith.constant 0 : index
    %c0_97 = arith.constant 0 : index
    %c0_98 = arith.constant 0 : index
    %161 = vector.load %arg13[%c0_96, %c0_97, %c0_98] : memref<1x8x64xf32, #tpu.memory_space<vmem>>, vector<1x8x64xf32>
    tpu.vector_store %arg13[%c0_96, %c0_97, %c0_98], %160 {strides = array<i32>} : memref<1x8x64xf32, #tpu.memory_space<vmem>>, vector<1x8x64xf32>,
    %162 = vector.shape_cast %159 : vector<8x4xf32> to vector<1x8x4xf32>
    %c0_99 = arith.constant 0 : index
    %c0_100 = arith.constant 0 : index
    %c0_101 = arith.constant 0 : index
    %163 = vector.load %arg14[%c0_99, %c0_100, %c0_101] : memref<1x8x4xf32, #tpu.memory_space<vmem>>, vector<1x8x4xf32>
    tpu.vector_store %arg14[%c0_99, %c0_100, %c0_101], %162 {strides = array<i32>} : memref<1x8x4xf32, #tpu.memory_space<vmem>>, vector<1x8x4xf32>,
    return
  }
  func.func @transform_0(%arg0: i32) -> (i32, i32) {
    %c0_i32 = arith.constant 0 : i32
    %c0_i32_0 = arith.constant 0 : i32
    %c0_i32_1 = arith.constant 0 : i32
    return %c0_i32, %c0_i32_0 : i32, i32
  }
  func.func @transform_1(%arg0: i32) -> (i32, i32, i32) {
    %c0_i32 = arith.constant 0 : i32
    %c0_i32_0 = arith.constant 0 : i32
    %c0_i32_1 = arith.constant 0 : i32
    return %arg0, %c0_i32, %c0_i32_0 : i32, i32, i32
  }
  func.func @transform_2(%arg0: i32) -> (i32, i32, i32) {
    %c0_i32 = arith.constant 0 : i32
    %c0_i32_0 = arith.constant 0 : i32
    %c0_i32_1 = arith.constant 0 : i32
    return %arg0, %c0_i32, %c0_i32_0 : i32, i32, i32
  }
  func.func @transform_3(%arg0: i32) -> (i32, i32, i32) {
    %c0_i32 = arith.constant 0 : i32
    %c0_i32_0 = arith.constant 0 : i32
    %c0_i32_1 = arith.constant 0 : i32
    return %arg0, %c0_i32, %c0_i32_0 : i32, i32, i32
  }
  func.func @transform_4(%arg0: i32) -> (i32, i32, i32) {
    %c0_i32 = arith.constant 0 : i32
    %c0_i32_0 = arith.constant 0 : i32
    %c0_i32_1 = arith.constant 0 : i32
    return %arg0, %c0_i32, %c0_i32_0 : i32, i32, i32
  }
  func.func @transform_5(%arg0: i32) -> (i32, i32, i32) {
    %c0_i32 = arith.constant 0 : i32
    %c0_i32_0 = arith.constant 0 : i32
    %c0_i32_1 = arith.constant 0 : i32
    return %arg0, %c0_i32, %c0_i32_0 : i32, i32, i32
  }
  func.func @transform_6(%arg0: i32) -> (i32, i32, i32) {
    %c0_i32 = arith.constant 0 : i32
    %c0_i32_0 = arith.constant 0 : i32
    %c0_i32_1 = arith.constant 0 : i32
    return %arg0, %c0_i32, %c0_i32_0 : i32, i32, i32
  }
  func.func @transform_7(%arg0: i32) -> (i32, i32) {
    %c0_i32 = arith.constant 0 : i32
    %c0_i32_0 = arith.constant 0 : i32
    %c0_i32_1 = arith.constant 0 : i32
    return %c0_i32, %c0_i32_0 : i32, i32
  }
  func.func @transform_8(%arg0: i32) -> (i32, i32) {
    %c0_i32 = arith.constant 0 : i32
    %c0_i32_0 = arith.constant 0 : i32
    %c0_i32_1 = arith.constant 0 : i32
    return %c0_i32, %c0_i32_0 : i32, i32
  }
  func.func @transform_9(%arg0: i32) -> (i32, i32) {
    %c0_i32 = arith.constant 0 : i32
    %c0_i32_0 = arith.constant 0 : i32
    %c0_i32_1 = arith.constant 0 : i32
    return %c0_i32, %c0_i32_0 : i32, i32
  }
  func.func @transform_10(%arg0: i32) -> (i32, i32) {
    %c0_i32 = arith.constant 0 : i32
    %c0_i32_0 = arith.constant 0 : i32
    %c0_i32_1 = arith.constant 0 : i32
    return %c0_i32, %c0_i32_0 : i32, i32
  }
  func.func @transform_11(%arg0: i32) -> i32 {
    %c0_i32 = arith.constant 0 : i32
    %c0_i32_0 = arith.constant 0 : i32
    return %c0_i32 : i32
  }
  func.func @transform_12(%arg0: i32) -> (i32, i32, i32) {
    %c0_i32 = arith.constant 0 : i32
    %c0_i32_0 = arith.constant 0 : i32
    %c0_i32_1 = arith.constant 0 : i32
    return %arg0, %c0_i32, %c0_i32_0 : i32, i32, i32
  }
  func.func @transform_13(%arg0: i32) -> (i32, i32, i32) {
    %c0_i32 = arith.constant 0 : i32
    %c0_i32_0 = arith.constant 0 : i32
    %c0_i32_1 = arith.constant 0 : i32
    return %arg0, %c0_i32, %c0_i32_0 : i32, i32, i32
  }
}

</mosaic_0001>

<llo_original>
// kernel: tpu_custom_call.1
$region0: #{tpu_custom_call.1}
  #allocation0 [shape = 'u32[]', space=smem, size = 0x4, offset = 0x4, fixed_abs, tag = 'smem constant byte address 0x4 - core index']
  #allocation1 [shape = 'u32[72,128]{1,0:T(1,128)}', space=vmem, size = 0x9000, scoped, tag = 'internal scratch']
  #allocation2 [shape = 'f32[1]{0:T(128)S(6)}', space=smem, size = 0x200, scoped, tag = 'scoped memory for tpu_custom_call.1']
  %s0 = inlined_call_operand.vmem [shape: f32[8,32], index: 0, kind: input, shape index: {}]
  %s1 = inlined_call_operand.vmem [shape: f32[1,32,128], index: 1, kind: input, shape index: {}]
  %s2 = inlined_call_operand.vmem [shape: f32[1,1,128], index: 2, kind: input, shape index: {}]
  %s3 = inlined_call_operand.vmem [shape: f32[4,32,16], index: 3, kind: input, shape index: {}]
  %s4 = inlined_call_operand.vmem [shape: f32[4,32,16], index: 4, kind: input, shape index: {}]
  %s5 = inlined_call_operand.vmem [shape: f32[4,1,16], index: 5, kind: input, shape index: {}]
  %s6 = inlined_call_operand.vmem [shape: f32[4,1,16], index: 6, kind: input, shape index: {}]
  %s7 = inlined_call_operand.vmem [shape: f32[16,32], index: 7, kind: input, shape index: {}]
  %s8 = inlined_call_operand.vmem [shape: f32[16,32], index: 8, kind: input, shape index: {}]
  %s9 = inlined_call_operand.vmem [shape: f32[1,32], index: 9, kind: input, shape index: {}]
  %s10 = inlined_call_operand.vmem [shape: f32[1,32], index: 10, kind: input, shape index: {}]
  %s11 = inlined_call_operand.<no memory space> [shape: f32[1], index: 11, kind: input, shape index: {}]
  %s12 = inlined_call_operand.hbm [shape: f32[1,8,64], index: 12, kind: output, shape index: {0}]
  %s13 = inlined_call_operand.vmem [shape: f32[1,8,4], index: 13, kind: output, shape index: {1}]
  %14 = xla_tuple %s12, %s13
  %s15 = sld [smem:[#allocation0]]
  $region66: #{tpu_custom_call.1} parent=0
    _
  %s17 = ssub.s32 1, %s15
  %s18 = scalar_select 0, %s17, %s15
  %19 = sst [smem:[#allocation2]] %s11
  $region1: #{tpu_custom_call.1} parent=0
    #allocation3 [shape = 'u8[4096]{0}', space=vmem, size = 0x1000, scoped, tag = 'output window, operand 0, single buffered']
    #allocation4 [shape = 's32[1]{0}', space=sflag, size = 0x4, scoped, tag = 'scoped memory for tpu_custom_call.1']
    %20 = vsyncpa [#allocation4], 0
    // Predicated region
    $region2: #{tpu_custom_call.1} parent=1 // pred_check
      _
    $region3: #{tpu_custom_call.1} parent=1 // pred_check_branch
      %22 = sbr.rel (0) target = $region5
    $region4: #{tpu_custom_call.1} parent=1 // pred_region
      _
    $region5: #{tpu_custom_call.1} parent=1 // pred_fallthru
      _
    // Predicated region
    $region6: #{tpu_custom_call.1} parent=1 // pred_check
      _
    $region7: #{tpu_custom_call.1} parent=1 // pred_check_branch
      %24 = sbr.rel (0) target = $region9
    $region8: #{tpu_custom_call.1} parent=1 // pred_region
      _
    $region9: #{tpu_custom_call.1} parent=1 // pred_fallthru
      _
    // Predicated region
    $region10: #{tpu_custom_call.1} parent=1 // pred_check
      _
    $region11: #{tpu_custom_call.1} parent=1 // pred_check_branch
      %26 = sbr.rel (0) target = $region13
    $region12: #{tpu_custom_call.1} parent=1 // pred_region
      _
    $region13: #{tpu_custom_call.1} parent=1 // pred_fallthru
      _
    // Predicated region
    $region14: #{tpu_custom_call.1} parent=1 // pred_check
      _
    $region15: #{tpu_custom_call.1} parent=1 // pred_check_branch
      %28 = sbr.rel (0) target = $region17
    $region16: #{tpu_custom_call.1} parent=1 // pred_region
      _
    $region17: #{tpu_custom_call.1} parent=1 // pred_fallthru
      _
    // Predicated region
    $region18: #{tpu_custom_call.1} parent=1 // pred_check
      _
    $region19: #{tpu_custom_call.1} parent=1 // pred_check_branch
      %30 = sbr.rel (0) target = $region21
    $region20: #{tpu_custom_call.1} parent=1 // pred_region
      _
    $region21: #{tpu_custom_call.1} parent=1 // pred_fallthru
      _
    // Predicated region
    $region22: #{tpu_custom_call.1} parent=1 // pred_check
      _
    $region23: #{tpu_custom_call.1} parent=1 // pred_check_branch
      %32 = sbr.rel (0) target = $region25
    $region24: #{tpu_custom_call.1} parent=1 // pred_region
      _
    $region25: #{tpu_custom_call.1} parent=1 // pred_fallthru
      _
    // Predicated region
    $region26: #{tpu_custom_call.1} parent=1 // pred_check
      _
    $region27: #{tpu_custom_call.1} parent=1 // pred_check_branch
      %34 = sbr.rel (0) target = $region29
    $region28: #{tpu_custom_call.1} parent=1 // pred_region
      _
    $region29: #{tpu_custom_call.1} parent=1 // pred_fallthru
      _
    // Predicated region
    $region30: #{tpu_custom_call.1} parent=1 // pred_check
      _
    $region31: #{tpu_custom_call.1} parent=1 // pred_check_branch
      %36 = sbr.rel (0) target = $region33
    $region32: #{tpu_custom_call.1} parent=1 // pred_region
      _
    $region33: #{tpu_custom_call.1} parent=1 // pred_fallthru
      _
    // Predicated region
    $region34: #{tpu_custom_call.1} parent=1 // pred_check
      _
    $region35: #{tpu_custom_call.1} parent=1 // pred_check_branch
      %38 = sbr.rel (0) target = $region37
    $region36: #{tpu_custom_call.1} parent=1 // pred_region
      _
    $region37: #{tpu_custom_call.1} parent=1 // pred_fallthru
      _
    // Predicated region
    $region38: #{tpu_custom_call.1} parent=1 // pred_check
      _
    $region39: #{tpu_custom_call.1} parent=1 // pred_check_branch
      %40 = sbr.rel (0) target = $region41
    $region40: #{tpu_custom_call.1} parent=1 // pred_region
      _
    $region41: #{tpu_custom_call.1} parent=1 // pred_fallthru
      _
    // Predicated region
    $region42: #{tpu_custom_call.1} parent=1 // pred_check
      _
    $region43: #{tpu_custom_call.1} parent=1 // pred_check_branch
      %42 = sbr.rel (0) target = $region45
    $region44: #{tpu_custom_call.1} parent=1 // pred_region
      _
    $region45: #{tpu_custom_call.1} parent=1 // pred_fallthru
      _
    // Predicated region
    $region46: #{tpu_custom_call.1} parent=1 // pred_check
      _
    $region47: #{tpu_custom_call.1} parent=1 // pred_check_branch
      %44 = sbr.rel (0) target = $region49
    $region48: #{tpu_custom_call.1} parent=1 // pred_region
      _
    $region49: #{tpu_custom_call.1} parent=1 // pred_fallthru
      _
    %v45 = vld [vmem:[%s0] sm:$0xff]
    %v46 = vld [vmem:[%s1] sm:$0xff]
    %v47 = vld [vmem:[%s1 + $0x8] sm:$0xff]
    %v48 = vld [vmem:[%s1 + $0x10] sm:$0xff]
    %v49 = vld [vmem:[%s1 + $0x18] sm:$0xff]
    %v50 = vld [vmem:[%s2] sm:$0x1]
    %v52 = vperm.slane %v50, 0
    %vm54 = vcmask 261120
    %v56 = vsel %vm54, %v45, 0
    %58 = vmatpush.msra.mxu0 0.0
    %59 = vmatpush.msra.mxu0 0.0
    %60 = vmatpush.msra.mxu0 0.0
    %61 = vmatpush.msra.mxu0 0.0
    %62 = vmatpush.msra.mxu0 0.0
    %63 = vmatpush.msra.mxu0 0.0
    %64 = vmatpush.msra.mxu0 0.0
    %65 = vmatpush.msra.mxu0 0.0
    %66 = vmatpush.msra.mxu0 0.0
    %67 = vmatpush.msra.mxu0 0.0
    %68 = vmatpush.msra.mxu0 0.0
    %69 = vmatpush.msra.mxu0 0.0
    %70 = vmatpush.msra.mxu0 %v49
    %71 = vmatpush.msra.mxu0 %v48
    %72 = vmatpush.msra.mxu0 %v47
    %73 = vmatpush.msra.mxu0 %v46
    %74 = vmatmul.f32.gmra.mxu0 %v56
    %v75 = vpop.f32.mrf.mxu0
    %v76 = vadd.f32 %v52, %v75
    %77 = vdwg.mxu0
    %vm78 = vcmp.ge.f32.partialorder %v76, 0.0
    %v79 = vmul.f32 %v76, 0.01
    %v80 = vsel %vm78, %v76, %v79
    %v81 = vld [vmem:[%s3] sm:$0xff]
    %v82 = vld [vmem:[%s3 + $0x8] sm:$0xff]
    %v83 = vld [vmem:[%s3 + $0x10] sm:$0xff]
    %v84 = vld [vmem:[%s3 + $0x18] sm:$0xff]
    %v85 = vld [vmem:[%s5] sm:$0x1]
    %v87 = vperm.slane %v85, 0
    %v90 = vsel %vm54, %v80, 0
    %92 = vmatpush.msra.mxu0 0.0
    %93 = vmatpush.msra.mxu0 0.0
    %94 = vmatpush.msra.mxu0 0.0
    %95 = vmatpush.msra.mxu0 0.0
    %96 = vmatpush.msra.mxu0 0.0
    %97 = vmatpush.msra.mxu0 0.0
    %98 = vmatpush.msra.mxu0 0.0
    %99 = vmatpush.msra.mxu0 0.0
    %100 = vmatpush.msra.mxu0 0.0
    %101 = vmatpush.msra.mxu0 0.0
    %102 = vmatpush.msra.mxu0 0.0
    %103 = vmatpush.msra.mxu0 0.0
    %104 = vmatpush.msra.mxu0 %v84
    %105 = vmatpush.msra.mxu0 %v83
    %106 = vmatpush.msra.mxu0 %v82
    %107 = vmatpush.msra.mxu0 %v81
    %108 = vmatmul.f32.gmra.mxu0 %v90
    %v109 = vpop.f32.mrf.mxu0
    %v110 = vadd.f32 %v87, %v109
    %111 = vdwg.mxu0
    %v112 = vld [vmem:[%s4] sm:$0xff]
    %v113 = vld [vmem:[%s4 + $0x8] sm:$0xff]
    %v114 = vld [vmem:[%s4 + $0x10] sm:$0xff]
    %v115 = vld [vmem:[%s4 + $0x18] sm:$0xff]
    %v116 = vld [vmem:[%s6] sm:$0x1]
    %v118 = vperm.slane %v116, 0
    %120 = vmatpush.msra.mxu0 0.0
    %121 = vmatpush.msra.mxu0 0.0
    %122 = vmatpush.msra.mxu0 0.0
    %123 = vmatpush.msra.mxu0 0.0
    %124 = vmatpush.msra.mxu0 0.0
    %125 = vmatpush.msra.mxu0 0.0
    %126 = vmatpush.msra.mxu0 0.0
    %127 = vmatpush.msra.mxu0 0.0
    %128 = vmatpush.msra.mxu0 0.0
    %129 = vmatpush.msra.mxu0 0.0
    %130 = vmatpush.msra.mxu0 0.0
    %131 = vmatpush.msra.mxu0 0.0
    %132 = vmatpush.msra.mxu0 %v115
    %133 = vmatpush.msra.mxu0 %v114
    %134 = vmatpush.msra.mxu0 %v113
    %135 = vmatpush.msra.mxu0 %v112
    %136 = vmatmul.f32.gmra.mxu0 %v90
    %v137 = vpop.f32.mrf.mxu0
    %v138 = vadd.f32 %v118, %v137
    %139 = vdwg.mxu0
    %vm140 = vcmp.ge.f32.partialorder %v110, 0.0
    %v141 = vmul.f32 %v110, 0.01
    %v142 = vsel %vm140, %v110, %v141
    %vm143 = vcmp.ge.f32.partialorder %v138, 0.0
    %v144 = vmul.f32 %v138, 0.01
    %v145 = vsel %vm143, %v138, %v144
    %s146 = scalar_lea.vmem %s3, 32
    %v147 = vld [vmem:[%s146] sm:$0xff]
    %v148 = vld [vmem:[%s146 + $0x8] sm:$0xff]
    %v149 = vld [vmem:[%s146 + $0x10] sm:$0xff]
    %v150 = vld [vmem:[%s146 + $0x18] sm:$0xff]
    %s151 = scalar_lea.vmem %s5, 1
    %v152 = vld [vmem:[%s151] sm:$0x1]
    %v154 = vperm.slane %v152, 0
    %156 = vrot.lane.b32.xlu0 %v80, 96
    %v157 = vpop.permute.xlu0 %156
    %v158 = vsel %vm54, %v157, 0
    %160 = vmatpush.msra.mxu0 0.0
    %161 = vmatpush.msra.mxu0 0.0
    %162 = vmatpush.msra.mxu0 0.0
    %163 = vmatpush.msra.mxu0 0.0
    %164 = vmatpush.msra.mxu0 0.0
    %165 = vmatpush.msra.mxu0 0.0
    %166 = vmatpush.msra.mxu0 0.0
    %167 = vmatpush.msra.mxu0 0.0
    %168 = vmatpush.msra.mxu0 0.0
    %169 = vmatpush.msra.mxu0 0.0
    %170 = vmatpush.msra.mxu0 0.0
    %171 = vmatpush.msra.mxu0 0.0
    %172 = vmatpush.msra.mxu0 %v150
    %173 = vmatpush.msra.mxu0 %v149
    %174 = vmatpush.msra.mxu0 %v148
    %175 = vmatpush.msra.mxu0 %v147
    %176 = vmatmul.f32.gmra.mxu0 %v158
    %v177 = vpop.f32.mrf.mxu0
    %v178 = vadd.f32 %v154, %v177
    %179 = vdwg.mxu0
    %s180 = scalar_lea.vmem %s4, 32
    %v181 = vld [vmem:[%s180] sm:$0xff]
    %v182 = vld [vmem:[%s180 + $0x8] sm:$0xff]
    %v183 = vld [vmem:[%s180 + $0x10] sm:$0xff]
    %v184 = vld [vmem:[%s180 + $0x18] sm:$0xff]
    %s185 = scalar_lea.vmem %s6, 1
    %v186 = vld [vmem:[%s185] sm:$0x1]
    %v188 = vperm.slane %v186, 0
    %190 = vmatpush.msra.mxu0 0.0
    %191 = vmatpush.msra.mxu0 0.0
    %192 = vmatpush.msra.mxu0 0.0
    %193 = vmatpush.msra.mxu0 0.0
    %194 = vmatpush.msra.mxu0 0.0
    %195 = vmatpush.msra.mxu0 0.0
    %196 = vmatpush.msra.mxu0 0.0
    %197 = vmatpush.msra.mxu0 0.0
    %198 = vmatpush.msra.mxu0 0.0
    %199 = vmatpush.msra.mxu0 0.0
    %200 = vmatpush.msra.mxu0 0.0
    %201 = vmatpush.msra.mxu0 0.0
    %202 = vmatpush.msra.mxu0 %v184
    %203 = vmatpush.msra.mxu0 %v183
    %204 = vmatpush.msra.mxu0 %v182
    %205 = vmatpush.msra.mxu0 %v181
    %206 = vmatmul.f32.gmra.mxu0 %v158
    %v207 = vpop.f32.mrf.mxu0
    %v208 = vadd.f32 %v188, %v207
    %209 = vdwg.mxu0
    %vm210 = vcmp.ge.f32.partialorder %v178, 0.0
    %v211 = vmul.f32 %v178, 0.01
    %v212 = vsel %vm210, %v178, %v211
    %vm213 = vcmp.ge.f32.partialorder %v208, 0.0
    %v214 = vmul.f32 %v208, 0.01
    %v215 = vsel %vm213, %v208, %v214
    %s216 = scalar_lea.vmem %s3, 64
    %v217 = vld [vmem:[%s216] sm:$0xff]
    %v218 = vld [vmem:[%s216 + $0x8] sm:$0xff]
    %v219 = vld [vmem:[%s216 + $0x10] sm:$0xff]
    %v220 = vld [vmem:[%s216 + $0x18] sm:$0xff]
    %s221 = scalar_lea.vmem %s5, 2
    %v222 = vld [vmem:[%s221] sm:$0x1]
    %v224 = vperm.slane %v222, 0
    %226 = vrot.lane.b32.xlu0 %v80, 64
    %v227 = vpop.permute.xlu0 %226
    %v228 = vsel %vm54, %v227, 0
    %230 = vmatpush.msra.mxu0 0.0
    %231 = vmatpush.msra.mxu0 0.0
    %232 = vmatpush.msra.mxu0 0.0
    %233 = vmatpush.msra.mxu0 0.0
    %234 = vmatpush.msra.mxu0 0.0
    %235 = vmatpush.msra.mxu0 0.0
    %236 = vmatpush.msra.mxu0 0.0
    %237 = vmatpush.msra.mxu0 0.0
    %238 = vmatpush.msra.mxu0 0.0
    %239 = vmatpush.msra.mxu0 0.0
    %240 = vmatpush.msra.mxu0 0.0
    %241 = vmatpush.msra.mxu0 0.0
    %242 = vmatpush.msra.mxu0 %v220
    %243 = vmatpush.msra.mxu0 %v219
    %244 = vmatpush.msra.mxu0 %v218
    %245 = vmatpush.msra.mxu0 %v217
    %246 = vmatmul.f32.gmra.mxu0 %v228
    %v247 = vpop.f32.mrf.mxu0
    %v248 = vadd.f32 %v224, %v247
    %249 = vdwg.mxu0
    %s250 = scalar_lea.vmem %s4, 64
    %v251 = vld [vmem:[%s250] sm:$0xff]
    %v252 = vld [vmem:[%s250 + $0x8] sm:$0xff]
    %v253 = vld [vmem:[%s250 + $0x10] sm:$0xff]
    %v254 = vld [vmem:[%s250 + $0x18] sm:$0xff]
    %s255 = scalar_lea.vmem %s6, 2
    %v256 = vld [vmem:[%s255] sm:$0x1]
    %v258 = vperm.slane %v256, 0
    %260 = vmatpush.msra.mxu0 0.0
    %261 = vmatpush.msra.mxu0 0.0
    %262 = vmatpush.msra.mxu0 0.0
    %263 = vmatpush.msra.mxu0 0.0
    %264 = vmatpush.msra.mxu0 0.0
    %265 = vmatpush.msra.mxu0 0.0
    %266 = vmatpush.msra.mxu0 0.0
    %267 = vmatpush.msra.mxu0 0.0
    %268 = vmatpush.msra.mxu0 0.0
    %269 = vmatpush.msra.mxu0 0.0
    %270 = vmatpush.msra.mxu0 0.0
    %271 = vmatpush.msra.mxu0 0.0
    %272 = vmatpush.msra.mxu0 %v254
    %273 = vmatpush.msra.mxu0 %v253
    %274 = vmatpush.msra.mxu0 %v252
    %275 = vmatpush.msra.mxu0 %v251
    %276 = vmatmul.f32.gmra.mxu0 %v228
    %v277 = vpop.f32.mrf.mxu0
    %v278 = vadd.f32 %v258, %v277
    %279 = vdwg.mxu0
    %vm280 = vcmp.ge.f32.partialorder %v248, 0.0
    %v281 = vmul.f32 %v248, 0.01
    %v282 = vsel %vm280, %v248, %v281
    %vm283 = vcmp.ge.f32.partialorder %v278, 0.0
    %v284 = vmul.f32 %v278, 0.01
    %v285 = vsel %vm283, %v278, %v284
    %s286 = scalar_lea.vmem %s3, 96
    %v287 = vld [vmem:[%s286] sm:$0xff]
    %v288 = vld [vmem:[%s286 + $0x8] sm:$0xff]
    %v289 = vld [vmem:[%s286 + $0x10] sm:$0xff]
    %v290 = vld [vmem:[%s286 + $0x18] sm:$0xff]
    %s291 = scalar_lea.vmem %s5, 3
    %v292 = vld [vmem:[%s291] sm:$0x1]
    %v294 = vperm.slane %v292, 0
    %296 = vrot.lane.b32.xlu0 %v80, 32
    %v297 = vpop.permute.xlu0 %296
    %v298 = vsel %vm54, %v297, 0
    %300 = vmatpush.msra.mxu0 0.0
    %301 = vmatpush.msra.mxu0 0.0
    %302 = vmatpush.msra.mxu0 0.0
    %303 = vmatpush.msra.mxu0 0.0
    %304 = vmatpush.msra.mxu0 0.0
    %305 = vmatpush.msra.mxu0 0.0
    %306 = vmatpush.msra.mxu0 0.0
    %307 = vmatpush.msra.mxu0 0.0
    %308 = vmatpush.msra.mxu0 0.0
    %309 = vmatpush.msra.mxu0 0.0
    %310 = vmatpush.msra.mxu0 0.0
    %311 = vmatpush.msra.mxu0 0.0
    %312 = vmatpush.msra.mxu0 %v290
    %313 = vmatpush.msra.mxu0 %v289
    %314 = vmatpush.msra.mxu0 %v288
    %315 = vmatpush.msra.mxu0 %v287
    %316 = vmatmul.f32.gmra.mxu0 %v298
    %v317 = vpop.f32.mrf.mxu0
    %v318 = vadd.f32 %v294, %v317
    %319 = vdwg.mxu0
    %s320 = scalar_lea.vmem %s4, 96
    %v321 = vld [vmem:[%s320] sm:$0xff]
    %v322 = vld [vmem:[%s320 + $0x8] sm:$0xff]
    %v323 = vld [vmem:[%s320 + $0x10] sm:$0xff]
    %v324 = vld [vmem:[%s320 + $0x18] sm:$0xff]
    %s325 = scalar_lea.vmem %s6, 3
    %v326 = vld [vmem:[%s325] sm:$0x1]
    %v328 = vperm.slane %v326, 0
    %330 = vmatpush.msra.mxu0 0.0
    %331 = vmatpush.msra.mxu0 0.0
    %332 = vmatpush.msra.mxu0 0.0
    %333 = vmatpush.msra.mxu0 0.0
    %334 = vmatpush.msra.mxu0 0.0
    %335 = vmatpush.msra.mxu0 0.0
    %336 = vmatpush.msra.mxu0 0.0
    %337 = vmatpush.msra.mxu0 0.0
    %338 = vmatpush.msra.mxu0 0.0
    %339 = vmatpush.msra.mxu0 0.0
    %340 = vmatpush.msra.mxu0 0.0
    %341 = vmatpush.msra.mxu0 0.0
    %342 = vmatpush.msra.mxu0 %v324
    %343 = vmatpush.msra.mxu0 %v323
    %344 = vmatpush.msra.mxu0 %v322
    %345 = vmatpush.msra.mxu0 %v321
    %346 = vmatmul.f32.gmra.mxu0 %v298
    %v347 = vpop.f32.mrf.mxu0
    %v348 = vadd.f32 %v328, %v347
    %349 = vdwg.mxu0
    %vm350 = vcmp.ge.f32.partialorder %v318, 0.0
    %v351 = vmul.f32 %v318, 0.01
    %v352 = vsel %vm350, %v318, %v351
    %vm353 = vcmp.ge.f32.partialorder %v348, 0.0
    %v354 = vmul.f32 %v348, 0.01
    %v355 = vsel %vm353, %v348, %v354
    %v356 = vld [vmem:[%s7] sm:$0xff]
    %v357 = vld [vmem:[%s7 + $0x8] sm:$0xff]
    %v358 = vld [vmem:[%s8] sm:$0xff]
    %v359 = vld [vmem:[%s8 + $0x8] sm:$0xff]
    %vm360 = vcmask 130048
    %v362 = vsel %vm360, %v145, 0
    %v365 = vsel %vm360, %v215, 0
    %v368 = vsel %vm360, %v285, 0
    %v371 = vsel %vm360, %v355, 0
    %373 = vmatpush.msra.mxu0 0.0
    %374 = vmatpush.msra.mxu0 0.0
    %375 = vmatpush.msra.mxu0 0.0
    %376 = vmatpush.msra.mxu0 0.0
    %377 = vmatpush.msra.mxu0 0.0
    %378 = vmatpush.msra.mxu0 0.0
    %379 = vmatpush.msra.mxu0 0.0
    %380 = vmatpush.msra.mxu0 0.0
    %381 = vmatpush.msra.mxu0 0.0
    %382 = vmatpush.msra.mxu0 0.0
    %383 = vmatpush.msra.mxu0 0.0
    %384 = vmatpush.msra.mxu0 0.0
    %385 = vmatpush.msra.mxu0 0.0
    %386 = vmatpush.msra.mxu0 0.0
    %387 = vmatpush.msra.mxu0 %v359
    %388 = vmatpush.msra.mxu0 %v358
    %389 = vmatmul.f32.gmra.mxu0 %v362
    %v390 = vpop.f32.mrf.mxu0
    %v391 = vadd.f32 0.0, %v390
    %392 = vmatmul.f32.gmra.mxu0 %v365
    %v393 = vpop.f32.mrf.mxu0
    %v394 = vadd.f32 0.0, %v393
    %395 = vmatmul.f32.gmra.mxu0 %v368
    %v396 = vpop.f32.mrf.mxu0
    %v397 = vadd.f32 0.0, %v396
    %398 = vmatmul.f32.gmra.mxu0 %v371
    %v399 = vpop.f32.mrf.mxu0
    %v400 = vadd.f32 0.0, %v399
    %401 = vdwg.mxu0
    %v403 = vsel %vm360, %v142, 0
    %v406 = vsel %vm360, %v212, 0
    %v409 = vsel %vm360, %v282, 0
    %v412 = vsel %vm360, %v352, 0
    %414 = vmatpush.msra.mxu0 0.0
    %415 = vmatpush.msra.mxu0 0.0
    %416 = vmatpush.msra.mxu0 0.0
    %417 = vmatpush.msra.mxu0 0.0
    %418 = vmatpush.msra.mxu0 0.0
    %419 = vmatpush.msra.mxu0 0.0
    %420 = vmatpush.msra.mxu0 0.0
    %421 = vmatpush.msra.mxu0 0.0
    %422 = vmatpush.msra.mxu0 0.0
    %423 = vmatpush.msra.mxu0 0.0
    %424 = vmatpush.msra.mxu0 0.0
    %425 = vmatpush.msra.mxu0 0.0
    %426 = vmatpush.msra.mxu0 0.0
    %427 = vmatpush.msra.mxu0 0.0
    %428 = vmatpush.msra.mxu0 %v357
    %429 = vmatpush.msra.mxu0 %v356
    %430 = vmatmul.f32.gmra.mxu0 %v403
    %v431 = vpop.f32.mrf.mxu0
    %v432 = vadd.f32 %v391, %v431
    %433 = vmatmul.f32.gmra.mxu0 %v406
    %v434 = vpop.f32.mrf.mxu0
    %v435 = vadd.f32 %v394, %v434
    %436 = vmatmul.f32.gmra.mxu0 %v409
    %v437 = vpop.f32.mrf.mxu0
    %v438 = vadd.f32 %v397, %v437
    %439 = vmatmul.f32.gmra.mxu0 %v412
    %v440 = vpop.f32.mrf.mxu0
    %v441 = vadd.f32 %v400, %v440
    %442 = vdwg.mxu0
    %v443 = vld [vmem:[%s9] sm:$0x1]
    %v445 = vperm.slane %v443, 0
    %v447 = vadd.f32 %v432, %v445
    %v448 = vadd.f32 %v435, %v445
    %v449 = vadd.f32 %v438, %v445
    %v450 = vadd.f32 %v441, %v445
    %vm451 = vcmp.ge.f32.partialorder %v447, 0.0
    %vm452 = vcmp.ge.f32.partialorder %v448, 0.0
    %vm453 = vcmp.ge.f32.partialorder %v449, 0.0
    %vm454 = vcmp.ge.f32.partialorder %v450, 0.0
    %v455 = vmul.f32 %v447, 0.01
    %v456 = vmul.f32 %v448, 0.01
    %v457 = vmul.f32 %v449, 0.01
    %v458 = vmul.f32 %v450, 0.01
    %v459 = vsel %vm451, %v447, %v455
    %v460 = vsel %vm452, %v448, %v456
    %v461 = vsel %vm453, %v449, %v457
    %v462 = vsel %vm454, %v450, %v458
    %v463 = vld [vmem:[%s10] sm:$0x1]
    %v465 = vperm.slane %v463, 0
    %v467 = vmul.f32 %v459, %v465
    %v468 = vmul.f32 %v460, %v465
    %v469 = vmul.f32 %v461, %v465
    %v470 = vmul.f32 %v462, %v465
    %v471 = vsel %vm54, %v467, 0.0
    %472 = vadd.xlane.f32.xlu0 %v471
    %v473 = vpop.xlane.xlu0 %472
    %v474 = vsel %vm54, %v468, 0.0
    %475 = vadd.xlane.f32.xlu0 %v474
    %v476 = vpop.xlane.xlu0 %475
    %v477 = vsel %vm54, %v469, 0.0
    %478 = vadd.xlane.f32.xlu0 %v477
    %v479 = vpop.xlane.xlu0 %478
    %v480 = vsel %vm54, %v470, 0.0
    %481 = vadd.xlane.f32.xlu0 %v480
    %v482 = vpop.xlane.xlu0 %481
    %s483 = sld [smem:[#allocation2]]
    %v484 = vstv %s483
    %v485 = vadd.f32 %v473, %v484
    %v486 = vadd.f32 %v476, %v484
    %v487 = vadd.f32 %v479, %v484
    %v488 = vadd.f32 %v482, %v484
    %v489 = vsub.f32 0.0, %v485
    %v490 = vsub.f32 0.0, %v486
    %v491 = vsub.f32 0.0, %v487
    %v492 = vsub.f32 0.0, %v488
    %v493 = vmul.f32 %v489, 1.442695
    %v494 = vpow.pop %v493
    %v495 = vmul.f32 %v490, 1.442695
    %v496 = vpow.pop %v495
    %v497 = vmul.f32 %v491, 1.442695
    %v498 = vpow.pop %v497
    %v499 = vmul.f32 %v492, 1.442695
    %v500 = vpow.pop %v499
    %v501 = vadd.f32 %v494, 1.0
    %v502 = vadd.f32 %v496, 1.0
    %v503 = vadd.f32 %v498, 1.0
    %v504 = vadd.f32 %v500, 1.0
    %v505 = vrcp.pop %v501
    %v506 = vmul.f32 %v501, %v505
    %v507 = vsub.f32 1.0, %v506
    %v508 = vmul.f32 %v505, %v507
    %v509 = vadd.f32 %v505, %v508
    %vm510 = vweird.f32 %v501
    %vm511 = vweird.f32 %v505
    %vm512 = vmor %vm510, %vm511
    %v513 = vsel %vm512, %v505, %v509
    %v514 = vand.u32 2147483647, %v501
    %vm515 = vcmp.eq.f32.partialorder %v514, 8.507059e+37
    %v516 = vand.u32 %v501, 2147483648
    %v517 = vor.u32 1.1754944e-38, %v516
    %v518 = vsel %vm515, %v517, %v513
    %v519 = vmul.f32 1.0, %v518
    %v520 = vrcp.pop %v502
    %v521 = vmul.f32 %v502, %v520
    %v522 = vsub.f32 1.0, %v521
    %v523 = vmul.f32 %v520, %v522
    %v524 = vadd.f32 %v520, %v523
    %vm525 = vweird.f32 %v502
    %vm526 = vweird.f32 %v520
    %vm527 = vmor %vm525, %vm526
    %v528 = vsel %vm527, %v520, %v524
    %v529 = vand.u32 2147483647, %v502
    %vm530 = vcmp.eq.f32.partialorder %v529, 8.507059e+37
    %v531 = vand.u32 %v502, 2147483648
    %v532 = vor.u32 1.1754944e-38, %v531
    %v533 = vsel %vm530, %v532, %v528
    %v534 = vmul.f32 1.0, %v533
    %v535 = vrcp.pop %v503
    %v536 = vmul.f32 %v503, %v535
    %v537 = vsub.f32 1.0, %v536
    %v538 = vmul.f32 %v535, %v537
    %v539 = vadd.f32 %v535, %v538
    %vm540 = vweird.f32 %v503
    %vm541 = vweird.f32 %v535
    %vm542 = vmor %vm540, %vm541
    %v543 = vsel %vm542, %v535, %v539
    %v544 = vand.u32 2147483647, %v503
    %vm545 = vcmp.eq.f32.partialorder %v544, 8.507059e+37
    %v546 = vand.u32 %v503, 2147483648
    %v547 = vor.u32 1.1754944e-38, %v546
    %v548 = vsel %vm545, %v547, %v543
    %v549 = vmul.f32 1.0, %v548
    %v550 = vrcp.pop %v504
    %v551 = vmul.f32 %v504, %v550
    %v552 = vsub.f32 1.0, %v551
    %v553 = vmul.f32 %v550, %v552
    %v554 = vadd.f32 %v550, %v553
    %vm555 = vweird.f32 %v504
    %vm556 = vweird.f32 %v550
    %vm557 = vmor %vm555, %vm556
    %v558 = vsel %vm557, %v550, %v554
    %v559 = vand.u32 2147483647, %v504
    %vm560 = vcmp.eq.f32.partialorder %v559, 8.507059e+37
    %v561 = vand.u32 %v504, 2147483648
    %v562 = vor.u32 1.1754944e-38, %v561
    %v563 = vsel %vm560, %v562, %v558
    %v564 = vmul.f32 1.0, %v563
    %v565 = vmul.f32 %v142, %v519
    %v566 = vmul.f32 %v212, %v534
    %v567 = vmul.f32 %v282, %v549
    %v568 = vmul.f32 %v352, %v564
    %v569 = vsub.f32 1.0, %v519
    %v570 = vsub.f32 1.0, %v534
    %v571 = vsub.f32 1.0, %v549
    %v572 = vsub.f32 1.0, %v564
    %v573 = vmul.f32 %v145, %v569
    %v574 = vmul.f32 %v215, %v570
    %v575 = vmul.f32 %v285, %v571
    %v576 = vmul.f32 %v355, %v572
    %v577 = vadd.f32 %v565, %v573
    %v578 = vadd.f32 %v566, %v574
    %v579 = vadd.f32 %v567, %v575
    %v580 = vadd.f32 %v568, %v576
    %582 = vrot.lane.b32.xlu0 %v578, 16
    %v583 = vpop.permute.xlu0 %582
    %586 = vrot.lane.b32.xlu0 %v579, 32
    %v587 = vpop.permute.xlu0 %586
    %590 = vrot.lane.b32.xlu0 %v580, 48
    %v591 = vpop.permute.xlu0 %590
    %v593 = vsel %vm360, %v577, %v583
    %v594 = vsel %vm54, %v593, %v587
    %vm595 = vcmask 392192
    %v596 = vsel %vm595, %v594, %v591
    %vm597 = vcmask 7168
    %v598 = vsel %vm597, %v519, %v534
    %vm599 = vcmask 15360
    %v600 = vsel %vm599, %v598, %v549
    %vm601 = vcmask 23552
    %v602 = vsel %vm601, %v600, %v564
    %vm603 = vcmask 523264
    %604 = vst.msk [vmem:[#allocation3] sm:$0xff] %vm603, %v596
    %vm605 = vcmask 31744
    %606 = vst.msk [vmem:[%s13] sm:$0xff] %vm605, %v602
    // Predicated region
    $region50: #{tpu_custom_call.1} parent=1 // pred_check
      _
    $region51: #{tpu_custom_call.1} parent=1 // pred_check_branch
      %608 = sbr.rel (0) target = $region53
    $region52: #{tpu_custom_call.1} parent=1 // pred_region
      %610 = vsyncadd [#allocation4], 0
      %s612 = sshll.u32 [#allocation3], 4
      %s613 = int_to_ptr.vmem [resolvable:$true] %s612
      %s614 = sshll.u32 %s12, 4
      %s615 = int_to_ptr.hbm [resolvable:$true] %s614
      %617 = dma.vmem_to_hbm [thread:$0]  %s613, 128, %s615, [#allocation4]
    $region53: #{tpu_custom_call.1} parent=1 // pred_fallthru
      _
    // Predicated region
    $region54: #{tpu_custom_call.1} parent=1 // pred_check
      _
    $region55: #{tpu_custom_call.1} parent=1 // pred_check_branch
      %619 = sbr.rel (0) target = $region57
    $region56: #{tpu_custom_call.1} parent=1 // pred_region
      _
    $region57: #{tpu_custom_call.1} parent=1 // pred_fallthru
      _
    // Predicated region
    $region58: #{tpu_custom_call.1} parent=1 // pred_check
      _
    $region59: #{tpu_custom_call.1} parent=1 // pred_check_branch
      %621 = sbr.rel (0) target = $region61
    $region60: #{tpu_custom_call.1} parent=1 // pred_region
      %623 = dma.done [#allocation4], 128
    $region61: #{tpu_custom_call.1} parent=1 // pred_fallthru
      _
    // Predicated region
    $region62: #{tpu_custom_call.1} parent=1 // pred_check
      _
    $region63: #{tpu_custom_call.1} parent=1 // pred_check_branch
      %625 = sbr.rel (0) target = $region65
    $region64: #{tpu_custom_call.1} parent=1 // pred_region
      _
    $region65: #{tpu_custom_call.1} parent=1 // pred_fallthru
      _
    %626 = vsyncpa [#allocation4], 1

</llo_original>
